<compile_context>
chip_gen: v7x
topology: tpu7x:2x2x1
jax: 0.10.0
libtpu: 0.0.40
codegen_flags: <defaults>
</compile_context>

<pallas_src>
import functools

import jax
import jax.numpy as jnp
from jax import lax
from jax.experimental import pallas as pl
from jax.experimental.pallas import tpu as pltpu


def _round_up(n, m):
    return (n + m - 1) // m * m


def _vmem_limit_bytes():
    """Chip-aware scoped-VMEM limit: ~3/4 of physical, capped at 96 MiB."""
    phys = 64 * 1024 * 1024  # conservative fallback (v7x per-TC size)
    try:
        info = pltpu.get_tpu_info()
        cap = getattr(info, "vmem_capacity_bytes", None)
        if cap:
            phys = int(cap)
    except Exception:
        pass
    return int(min(phys * 3 // 4, 96 * 1024 * 1024))


def _use_bf16_act(mxu_dtype):
    """bf16 layer-1 tanh only where the EUP/VPU support bf16 (v6e / v7x)."""
    if jnp.dtype(mxu_dtype) != jnp.dtype(jnp.bfloat16):
        return False
    try:
        kind = jax.devices()[0].device_kind.lower()
    except Exception:
        return False
    return ("v6" in kind) or ("v7" in kind)


def _choose_tile(batch, d_in, h1p, h2p, x_itemsize, vmem_limit_bytes, block_batch):
    """Pick the batch tile from the VMEM budget (unless explicitly overridden)."""
    bp = _round_up(batch, 8)
    if block_batch is not None:
        return _round_up(max(8, min(int(block_batch), bp)), 8)

    d_in_pad = _round_up(d_in, 128)
    # Rough live bytes per batch-tile row:
    #   x double-buffered (lane-padded to 128)  + layer-1 act (f32 + bf16 copy)
    #   + layer-2 pre/post activations (f32).
    bytes_per_row = 2 * d_in_pad * x_itemsize + h1p * 6 + 2 * h2p * 4
    tb = (vmem_limit_bytes // 2) // max(bytes_per_row, 1)
    tb = max(8, min(int(tb), 16384))
    if bp >= 16:
        # Keep >= 2 tiles so the "parallel" grid axis spans both v7x TensorCores.
        tb = min(tb, _round_up(pl.cdiv(bp, 2), 8))
    tb = min(tb, bp)
    return _round_up(tb, 8)


def _kernel_embed_kernel(x_ref, w1_ref, b1_ref, w2_ref, b2_ref, out_ref, *,
                         batch, mxu_dtype, bf16_act, mask_last):
    """One batch tile: MLP forward + (masked) partial row-sum.

    x_ref  : (TB, D_in)   caller dtype (streamed per grid step; cast in-kernel)
    w1_ref : (D_in, H1p)  mxu dtype (resident)
    b1_ref : (1, H1p)     f32       (resident)
    w2_ref : (H1p, H2p)   mxu dtype (resident)
    b2_ref : (1, H2p)     f32       (resident)
    out_ref: (1, 1, H2p)  f32       per-tile partial sum over rows
    """
    i = pl.program_id(0)
    tb = x_ref.shape[0]

    # In-kernel narrow cast (no extra HBM pass in the wrapper).
    x = x_ref[...].astype(mxu_dtype)

    # Layer 1: Linear (MXU, f32 accumulate) + tanh.
    h = jnp.dot(x, w1_ref[...], preferred_element_type=jnp.float32) + b1_ref[...]
    if bf16_act:
        # bf16 tanh on v6e/v7x EUP; feeds the layer-2 MXU directly.
        h = jnp.tanh(h.astype(jnp.bfloat16))
    else:
        h = jnp.tanh(h).astype(w2_ref.dtype)

    # Layer 2 (last layer, act_last = nonlinearity), activation kept in f32.
    h = jnp.dot(h, w2_ref[...], preferred_element_type=jnp.float32) + b2_ref[...]
    h = jnp.tanh(h)                                                  # (TB, H2p) f32

    def _store(vals):
        # Per-tile partial sum over batch rows; final mean done in the wrapper
        # so this grid axis stays independent ("parallel") across tiles / TCs.
        out_ref[0] = jnp.sum(vals, axis=0, keepdims=True)            # (1, H2p)

    if not mask_last:
        _store(h)
    else:
        last = pl.num_programs(0) - 1

        @pl.when(i < last)
        def _():
            _store(h)

        @pl.when(i == last)
        def _():
            # Mask rows past the true batch (last tile may read OOB garbage).
            row = i * tb + lax.broadcasted_iota(jnp.int32, (tb, 1), 0)
            _store(jnp.where(row < batch, h, 0.0))


def prepare_params(params, mxu_dtype=jnp.bfloat16):
    """Pad hidden widths to 128 lanes and cast weights once (hoisted off the
    per-call hot path).  Weights stored (in, out): x @ W + b == torch Linear."""
    w1, b1, w2, b2 = params["w1"], params["b1"], params["w2"], params["b2"]
    d_in, h1 = w1.shape
    h2 = w2.shape[1]
    h1p, h2p = _round_up(h1, 128), _round_up(h2, 128)
    mxu_dtype = jnp.dtype(mxu_dtype)

    w1p = jnp.zeros((d_in, h1p), mxu_dtype).at[:, :h1].set(w1.astype(mxu_dtype))
    b1p = jnp.zeros((1, h1p), jnp.float32).at[:, :h1].set(
        b1.astype(jnp.float32).reshape(1, h1))
    w2p = jnp.zeros((h1p, h2p), mxu_dtype).at[:h1, :h2].set(w2.astype(mxu_dtype))
    b2p = jnp.zeros((1, h2p), jnp.float32).at[:, :h2].set(
        b2.astype(jnp.float32).reshape(1, h2))
    return {"w1p": w1p, "b1p": b1p, "w2p": w2p, "b2p": b2p, "h2": h2}


def kernel_embed_net(x, params, *, block_batch=None, mxu_dtype=jnp.bfloat16):
    """Wrapper mirroring KernelEmbedNet.forward.

    x: (B, D_in) array, or a tuple of arrays concatenated along dim 1.
    params: either the raw dict {w1,b1,w2,b2} or the output of prepare_params().
    Pass mxu_dtype=jnp.float32 (to prepare_params / here) for bit-closer-to-torch
    numerics at the cost of MXU throughput.
    """
    if isinstance(x, tuple):
        x = jnp.concatenate(x, axis=1)

    prepared = params if "w1p" in params else prepare_params(params, mxu_dtype)
    w1p, b1p, w2p, b2p = (prepared["w1p"], prepared["b1p"],
                          prepared["w2p"], prepared["b2p"])
    h2 = prepared["h2"]
    mxu_dtype = w1p.dtype

    batch, d_in = x.shape
    h1p, h2p = w1p.shape[1], w2p.shape[1]

    vmem_limit = _vmem_limit_bytes()
    tb = _choose_tile(batch, d_in, h1p, h2p, x.dtype.itemsize, vmem_limit,
                      block_batch)
    num_tiles = pl.cdiv(batch, tb)
    mask_last = (batch % tb) != 0
    bf16_act = _use_bf16_act(mxu_dtype)

    cost = pl.CostEstimate(
        flops=2 * num_tiles * tb * (d_in * h1p + h1p * h2p),
        transcendentals=num_tiles * tb * (h1p + h2p),
        bytes_accessed=(batch * d_in * x.dtype.itemsize
                        + (w1p.size + w2p.size) * w1p.dtype.itemsize
                        + (b1p.size + b2p.size) * 4
                        + num_tiles * h2p * 4),
    )

    partials = pl.pallas_call(
        functools.partial(_kernel_embed_kernel, batch=batch, mxu_dtype=mxu_dtype,
                          bf16_act=bf16_act, mask_last=mask_last),
        out_shape=jax.ShapeDtypeStruct((num_tiles, 1, h2p), jnp.float32),
        grid=(num_tiles,),
        in_specs=[
            pl.BlockSpec((tb, d_in), lambda i: (i, 0)),      # streamed x tiles
            pl.BlockSpec((d_in, h1p), lambda i: (0, 0)),     # resident weights/biases
            pl.BlockSpec((1, h1p), lambda i: (0, 0)),
            pl.BlockSpec((h1p, h2p), lambda i: (0, 0)),
            pl.BlockSpec((1, h2p), lambda i: (0, 0)),
        ],
        out_specs=pl.BlockSpec((1, 1, h2p), lambda i: (i, 0, 0)),
        compiler_params=pltpu.CompilerParams(
            # Per-tile partial sums are independent -> megacore-shardable.
            dimension_semantics=("parallel",),
            vmem_limit_bytes=vmem_limit,
        ),
        cost_estimate=cost,
    )(x, w1p, b1p, w2p, b2p)

    # Final reduction over tiles + mean normalization + un-pad (negligible work).
    out = jnp.sum(partials, axis=(0, 1)) / batch            # (H2p,)
    return out[:h2].reshape(1, h2)


def init_params(key, input_dim, hidden_dims):
    """Deterministic synthetic init (Xavier-ish); shapes match nn.Linear layers."""
    k1, k2, k3, k4 = jax.random.split(key, 4)
    h1, h2 = hidden_dims
    w1 = jax.random.normal(k1, (input_dim, h1), jnp.float32) / jnp.sqrt(input_dim)
    b1 = 0.01 * jax.random.normal(k2, (1, h1), jnp.float32)
    w2 = jax.random.normal(k3, (h1, h2), jnp.float32) / jnp.sqrt(h1)
    b2 = 0.01 * jax.random.normal(k4, (1, h2), jnp.float32)
    return {"w1": w1, "b1": b1, "w2": w2, "b2": b2}


def _reference(x, params):
    """Pure-JAX f32 reference of the same forward, for a sanity check."""
    if isinstance(x, tuple):
        x = jnp.concatenate(x, axis=1)
    h = jnp.tanh(x @ params["w1"] + params["b1"])
    h = jnp.tanh(h @ params["w2"] + params["b2"])
    return jnp.mean(h, axis=0, keepdim=True) if False else jnp.mean(h, axis=0, keepdims=True)


if __name__ == "__main__":
    # Shapes consistent with the module: input_dim=16, hidden_dims=(32, 32),
    # nonlinearity=tanh.
    batch, input_dim = 100, 16
    hidden_dims = (32, 32)

    key = jax.random.PRNGKey(0)
    k_param, k_x = jax.random.split(key)
    params = init_params(k_param, input_dim, hidden_dims)
    x = jax.random.normal(k_x, (batch, input_dim), jnp.float32)

    # Pad / cast the weights once (hoisted off the hot path).
    prepared = prepare_params(params)

    # Auto-sized tile: batch=100 -> 2 tiles with a masked partial last tile.
    out = jax.block_until_ready(kernel_embed_net(x, prepared))
    ref = _reference(x, params)
    assert out.shape == (1, hidden_dims[-1])
    # bf16 MXU inputs (f32 accumulation) -> loosened tolerance vs the f32 reference.
    assert jnp.allclose(out, ref, atol=2e-2, rtol=2e-2), \
        float(jnp.max(jnp.abs(out - ref)))

    # Evenly divisible batch exercises the statically mask-free path.
    x2 = jax.random.normal(jax.random.PRNGKey(1), (128, input_dim), jnp.float32)
    out2 = jax.block_until_ready(kernel_embed_net(x2, prepared, block_batch=64))
    ref2 = _reference(x2, params)
    assert jnp.allclose(out2, ref2, atol=2e-2, rtol=2e-2), \
        float(jnp.max(jnp.abs(out2 - ref2)))

    print("KERNEL_OK")
</pallas_src>

<mosaic_0001>
module attributes {stable_mosaic.version = 11 : i64} {
  func.func @_kernel_embed_kernel(%arg0: i32, %arg1: memref<56x16xf32, #tpu.memory_space<vmem>>, %arg2: memref<16x128xbf16, #tpu.memory_space<vmem>>, %arg3: memref<1x128xf32, #tpu.memory_space<vmem>>, %arg4: memref<128x128xbf16, #tpu.memory_space<vmem>>, %arg5: memref<1x128xf32, #tpu.memory_space<vmem>>, %arg6: memref<1x1x128xf32, #tpu.memory_space<vmem>>) attributes {dimension_semantics = [#tpu.dimension_semantics<parallel>], iteration_bounds = array<i64: 2>, scalar_prefetch = 0 : i64, scratch_operands = 0 : i64, tpu.core_type = #tpu.core_type<tc>, window_params = [{transform_indices = @transform_0, window_bounds = array<i64: 56, 16>}, {pipeline_mode = #tpu.pipeline_mode<synchronous>, transform_indices = @transform_1, window_bounds = array<i64: 16, 128>}, {pipeline_mode = #tpu.pipeline_mode<synchronous>, transform_indices = @transform_2, window_bounds = array<i64: 1, 128>}, {pipeline_mode = #tpu.pipeline_mode<synchronous>, transform_indices = @transform_3, window_bounds = array<i64: 128, 128>}, {pipeline_mode = #tpu.pipeline_mode<synchronous>, transform_indices = @transform_4, window_bounds = array<i64: 1, 128>}, {transform_indices = @transform_5, window_bounds = array<i64: 1, 1, 128>}]} {
    %c0 = arith.constant 0 : index
    %c0_0 = arith.constant 0 : index
    %0 = vector.load %arg1[%c0, %c0_0] : memref<56x16xf32, #tpu.memory_space<vmem>>, vector<56x16xf32>
    %1 = arith.truncf %0 : vector<56x16xf32> to vector<56x16xbf16>
    %c0_1 = arith.constant 0 : index
    %c0_2 = arith.constant 0 : index
    %2 = vector.load %arg2[%c0_1, %c0_2] : memref<16x128xbf16, #tpu.memory_space<vmem>>, vector<16x128xbf16>
    %cst = arith.constant dense<0.000000e+00> : vector<56x128xf32>
    %3 = tpu.matmul %1, %2, %cst {dimension_numbers = #tpu.dot_dimension_numbers<[1], [0], [0], [1], [0, 0, 1, 1], [], []>} : vector<56x16xbf16>, vector<16x128xbf16>, vector<56x128xf32> -> vector<56x128xf32>
    %c0_3 = arith.constant 0 : index
    %c0_4 = arith.constant 0 : index
    %4 = vector.load %arg3[%c0_3, %c0_4] : memref<1x128xf32, #tpu.memory_space<vmem>>, vector<1x128xf32>
    %5 = vector.broadcast %4 : vector<1x128xf32> to vector<56x128xf32>
    %6 = arith.addf %3, %5 : vector<56x128xf32>
    %7 = math.tanh %6 : vector<56x128xf32>
    %8 = arith.truncf %7 : vector<56x128xf32> to vector<56x128xbf16>
    %c0_5 = arith.constant 0 : index
    %c0_6 = arith.constant 0 : index
    %9 = vector.load %arg4[%c0_5, %c0_6] : memref<128x128xbf16, #tpu.memory_space<vmem>>, vector<128x128xbf16>
    %cst_7 = arith.constant dense<0.000000e+00> : vector<56x128xf32>
    %10 = tpu.matmul %8, %9, %cst_7 {dimension_numbers = #tpu.dot_dimension_numbers<[1], [0], [0], [1], [0, 0, 1, 1], [], []>} : vector<56x128xbf16>, vector<128x128xbf16>, vector<56x128xf32> -> vector<56x128xf32>
    %c0_8 = arith.constant 0 : index
    %c0_9 = arith.constant 0 : index
    %11 = vector.load %arg5[%c0_8, %c0_9] : memref<1x128xf32, #tpu.memory_space<vmem>>, vector<1x128xf32>
    %12 = vector.broadcast %11 : vector<1x128xf32> to vector<56x128xf32>
    %13 = arith.addf %10, %12 : vector<56x128xf32>
    %14 = math.tanh %13 : vector<56x128xf32>
    %c1_i32 = arith.constant 1 : i32
    %15 = arith.cmpi slt, %arg0, %c1_i32 : i32
    %16 = arith.extui %15 : i1 to i32
    %c0_i32 = arith.constant 0 : i32
    %17 = arith.cmpi ne, %16, %c0_i32 : i32
    scf.if %17 {
      %cst_12 = arith.constant dense<0.000000e+00> : vector<128xf32>
      %21 = vector.multi_reduction <add>, %14, %cst_12 [0] : vector<56x128xf32> to vector<128xf32>
      %22 = vector.shape_cast %21 : vector<128xf32> to vector<1x128xf32>
      %c0_13 = arith.constant 0 : index
      %c0_14 = arith.constant 0 : index
      %c0_15 = arith.constant 0 : index
      %23 = vector.load %arg6[%c0_13, %c0_14, %c0_15] : memref<1x1x128xf32, #tpu.memory_space<vmem>>, vector<1x1x128xf32>
      %24 = vector.shape_cast %23 : vector<1x1x128xf32> to vector<1x128xf32>
      %25 = vector.shape_cast %22 : vector<1x128xf32> to vector<1x1x128xf32>
      tpu.vector_store %arg6[%c0_13, %c0_14, %c0_15], %25 {strides = array<i32>} : memref<1x1x128xf32, #tpu.memory_space<vmem>>, vector<1x1x128xf32>,
    } else {
    }
    %c1_i32_10 = arith.constant 1 : i32
    %18 = arith.cmpi eq, %arg0, %c1_i32_10 : i32
    %19 = arith.extui %18 : i1 to i32
    %c0_i32_11 = arith.constant 0 : i32
    %20 = arith.cmpi ne, %19, %c0_i32_11 : i32
    scf.if %20 {
      %c56_i32 = arith.constant 56 : i32
      %21 = arith.muli %arg0, %c56_i32 : i32
      %22 = tpu.iota {dimensions = array<i32: 0>} : vector<56x1xi32>
      %23 = vector.broadcast %21 : i32 to vector<56x1xi32>
      %24 = arith.addi %23, %22 : vector<56x1xi32>
      %c100_i32 = arith.constant 100 : i32
      %25 = vector.broadcast %c100_i32 : i32 to vector<56x1xi32>
      %26 = arith.cmpi slt, %24, %25 : vector<56x1xi32>
      %cst_12 = arith.constant 0.000000e+00 : f32
      %27 = vector.shape_cast %26 : vector<56x1xi1> to vector<56x1xi1>
      %28 = vector.broadcast %27 : vector<56x1xi1> to vector<56x128xi1>
      %29 = vector.broadcast %cst_12 : f32 to vector<56x128xf32>
      %30 = arith.select %28, %14, %29 : vector<56x128xi1>, vector<56x128xf32>
      %cst_13 = arith.constant dense<0.000000e+00> : vector<128xf32>
      %31 = vector.multi_reduction <add>, %30, %cst_13 [0] : vector<56x128xf32> to vector<128xf32>
      %32 = vector.shape_cast %31 : vector<128xf32> to vector<1x128xf32>
      %c0_14 = arith.constant 0 : index
      %c0_15 = arith.constant 0 : index
      %c0_16 = arith.constant 0 : index
      %33 = vector.load %arg6[%c0_14, %c0_15, %c0_16] : memref<1x1x128xf32, #tpu.memory_space<vmem>>, vector<1x1x128xf32>
      %34 = vector.shape_cast %33 : vector<1x1x128xf32> to vector<1x128xf32>
      %35 = vector.shape_cast %32 : vector<1x128xf32> to vector<1x1x128xf32>
      tpu.vector_store %arg6[%c0_14, %c0_15, %c0_16], %35 {strides = array<i32>} : memref<1x1x128xf32, #tpu.memory_space<vmem>>, vector<1x1x128xf32>,
    } else {
    }
    return
  }
  func.func @transform_0(%arg0: i32) -> (i32, i32) {
    %c0_i32 = arith.constant 0 : i32
    %c0_i32_0 = arith.constant 0 : i32
    return %arg0, %c0_i32 : i32, i32
  }
  func.func @transform_1(%arg0: i32) -> (i32, i32) {
    %c0_i32 = arith.constant 0 : i32
    %c0_i32_0 = arith.constant 0 : i32
    %c0_i32_1 = arith.constant 0 : i32
    return %c0_i32, %c0_i32_0 : i32, i32
  }
  func.func @transform_2(%arg0: i32) -> (i32, i32) {
    %c0_i32 = arith.constant 0 : i32
    %c0_i32_0 = arith.constant 0 : i32
    %c0_i32_1 = arith.constant 0 : i32
    return %c0_i32, %c0_i32_0 : i32, i32
  }
  func.func @transform_3(%arg0: i32) -> (i32, i32) {
    %c0_i32 = arith.constant 0 : i32
    %c0_i32_0 = arith.constant 0 : i32
    %c0_i32_1 = arith.constant 0 : i32
    return %c0_i32, %c0_i32_0 : i32, i32
  }
  func.func @transform_4(%arg0: i32) -> (i32, i32) {
    %c0_i32 = arith.constant 0 : i32
    %c0_i32_0 = arith.constant 0 : i32
    %c0_i32_1 = arith.constant 0 : i32
    return %c0_i32, %c0_i32_0 : i32, i32
  }
  func.func @transform_5(%arg0: i32) -> (i32, i32, i32) {
    %c0_i32 = arith.constant 0 : i32
    %c0_i32_0 = arith.constant 0 : i32
    %c0_i32_1 = arith.constant 0 : i32
    return %arg0, %c0_i32, %c0_i32_0 : i32, i32, i32
  }
}

</mosaic_0001>

<llo_original>
// kernel: tpu_custom_call.1
$region0: #{tpu_custom_call.1}
  #allocation0 [shape = 'u32[]', space=smem, size = 0x4, offset = 0x4, fixed_abs, tag = 'smem constant byte address 0x4 - core index']
  #allocation1 [shape = 'u32[144,128]{1,0:T(1,128)}', space=vmem, size = 0x12000, scoped, tag = 'internal scratch']
  %s0 = inlined_call_operand.vmem [shape: f32[100,16], index: 0, kind: input, shape index: {}]
  %s1 = inlined_call_operand.vmem [shape: bf16[16,128], index: 1, kind: input, shape index: {}]
  %s2 = inlined_call_operand.vmem [shape: f32[1,128], index: 2, kind: input, shape index: {}]
  %s3 = inlined_call_operand.vmem [shape: bf16[128,128], index: 3, kind: input, shape index: {}]
  %s4 = inlined_call_operand.vmem [shape: f32[1,128], index: 4, kind: input, shape index: {}]
  %s5 = inlined_call_operand.hbm [shape: f32[2,1,128], index: 5, kind: output, shape index: {}]
  %s6 = sld [smem:[#allocation0]]
  $region61: #{tpu_custom_call.1} parent=0
    _
  %s8 = ssub.s32 1, %s6
  %s9 = scalar_select 0, %s8, %s6
  $region1: #{tpu_custom_call.1} parent=0
    #allocation2 [shape = 'u8[1024]{0}', space=vmem, size = 0x400, scoped, tag = 'output window, operand 0']
    #allocation3 [shape = 's32[2]{0}', space=sflag, size = 0x8, scoped, tag = 'scoped memory for tpu_custom_call.1']
    %10 = vsyncpa [#allocation3], 0
    %s11 = scalar_lea.sflag [#allocation3], 1
    %12 = vsyncpa %s11, 0
    loop: start=0, step=1, limit=4
    $region2: #{tpu_custom_call.1} parent=1 // loop_pre_header
      _
    $region3: #{tpu_custom_call.1} parent=1 // loop_header
      %s14 = sphi 0, %s18
      %p15 = scmp.ge.s32.totalorder %s14, 4
      %s24 = sphi 0, %s26
      %s27 = sphi 0, %s24
      %s28 = sphi 0, %s27
      %s44 = sphi 0, %s28
      %s48 = sphi 0, %s48
      %s50 = sphi 0, %s48
      %s51 = sphi 0, %s50
      %s65 = sphi 0, %s51
      %s69 = sphi 0, %s69
      %s71 = sphi 0, %s69
      %s72 = sphi 0, %s71
      %s86 = sphi 0, %s72
      %s90 = sphi 0, %s90
      %s92 = sphi 0, %s90
      %s93 = sphi 0, %s92
      %s107 = sphi 0, %s93
      %s111 = sphi 0, %s111
      %s113 = sphi 0, %s111
      %s114 = sphi 0, %s113
      %s128 = sphi 0, %s114
      %s134 = sphi 0, %s136
      %s137 = sphi 0, %s134
      %s138 = sphi 0, %s137
      %s154 = sphi 0, %s138
    $region4: #{tpu_custom_call.1} parent=1 // loop_header_branch
      %17 = sbr.rel (%p15) target = $region8
    $region5: #{tpu_custom_call.1} parent=1 // loop_body
      %s19 = ssub.s32 %s14, 1
      %s20 = ssub.s32 %s14, 2
      %s21 = sadd.s32 %s14, 1
      %s22 = ssub.s32 %s14, %s21
      %p23 = scmp.eq.s32.totalorder %s22, 0
      %s25 = sadd.s32 %s24, 1
      %s26 = scalar_select %p23, %s24, %s25
      %p29 = pneg %p23
      %p30 = scmp.eq.s32.totalorder %s14, 1
      %p31 = por %p29, %p30
      %p32 = scmp.ne.s32.totalorder %s24, %s27
      %p33 = scmp.eq.s32.totalorder %s14, 0
      %p34 = por %p32, %p33
      %p35 = scmp.ne.s32.totalorder %s24, %s27
      %p36 = scmp.eq.s32.totalorder %s19, 1
      %p37 = por %p35, %p36
      %p38 = scmp.ne.s32.totalorder %s27, %s28
      %p39 = scmp.eq.s32.totalorder %s19, 0
      %p40 = por %p38, %p39
      %p41 = scmp.ne.s32.totalorder %s27, %s28
      %p42 = scmp.eq.s32.totalorder %s20, 1
      %p43 = por %p41, %p42
      %p45 = scmp.ne.s32.totalorder %s28, %s44
      %p46 = scmp.eq.s32.totalorder %s20, 0
      %p47 = por %p45, %p46
      %s49 = sadd.s32 %s48, 1
      %p52 = scmp.eq.s32.totalorder %s14, 1
      %p53 = scmp.ne.s32.totalorder %s48, %s50
      %p54 = scmp.eq.s32.totalorder %s14, 0
      %p55 = por %p53, %p54
      %p56 = scmp.ne.s32.totalorder %s48, %s50
      %p57 = scmp.eq.s32.totalorder %s19, 1
      %p58 = por %p56, %p57
      %p59 = scmp.ne.s32.totalorder %s50, %s51
      %p60 = scmp.eq.s32.totalorder %s19, 0
      %p61 = por %p59, %p60
      %p62 = scmp.ne.s32.totalorder %s50, %s51
      %p63 = scmp.eq.s32.totalorder %s20, 1
      %p64 = por %p62, %p63
      %p66 = scmp.ne.s32.totalorder %s51, %s65
      %p67 = scmp.eq.s32.totalorder %s20, 0
      %p68 = por %p66, %p67
      %s70 = sadd.s32 %s69, 1
      %p73 = scmp.eq.s32.totalorder %s14, 1
      %p74 = scmp.ne.s32.totalorder %s69, %s71
      %p75 = scmp.eq.s32.totalorder %s14, 0
      %p76 = por %p74, %p75
      %p77 = scmp.ne.s32.totalorder %s69, %s71
      %p78 = scmp.eq.s32.totalorder %s19, 1
      %p79 = por %p77, %p78
      %p80 = scmp.ne.s32.totalorder %s71, %s72
      %p81 = scmp.eq.s32.totalorder %s19, 0
      %p82 = por %p80, %p81
      %p83 = scmp.ne.s32.totalorder %s71, %s72
      %p84 = scmp.eq.s32.totalorder %s20, 1
      %p85 = por %p83, %p84
      %p87 = scmp.ne.s32.totalorder %s72, %s86
      %p88 = scmp.eq.s32.totalorder %s20, 0
      %p89 = por %p87, %p88
      %s91 = sadd.s32 %s90, 1
      %p94 = scmp.eq.s32.totalorder %s14, 1
      %p95 = scmp.ne.s32.totalorder %s90, %s92
      %p96 = scmp.eq.s32.totalorder %s14, 0
      %p97 = por %p95, %p96
      %p98 = scmp.ne.s32.totalorder %s90, %s92
      %p99 = scmp.eq.s32.totalorder %s19, 1
      %p100 = por %p98, %p99
      %p101 = scmp.ne.s32.totalorder %s92, %s93
      %p102 = scmp.eq.s32.totalorder %s19, 0
      %p103 = por %p101, %p102
      %p104 = scmp.ne.s32.totalorder %s92, %s93
      %p105 = scmp.eq.s32.totalorder %s20, 1
      %p106 = por %p104, %p105
      %p108 = scmp.ne.s32.totalorder %s93, %s107
      %p109 = scmp.eq.s32.totalorder %s20, 0
      %p110 = por %p108, %p109
      %s112 = sadd.s32 %s111, 1
      %p115 = scmp.eq.s32.totalorder %s14, 1
      %p116 = scmp.ne.s32.totalorder %s111, %s113
      %p117 = scmp.eq.s32.totalorder %s14, 0
      %p118 = por %p116, %p117
      %p119 = scmp.ne.s32.totalorder %s111, %s113
      %p120 = scmp.eq.s32.totalorder %s19, 1
      %p121 = por %p119, %p120
      %p122 = scmp.ne.s32.totalorder %s113, %s114
      %p123 = scmp.eq.s32.totalorder %s19, 0
      %p124 = por %p122, %p123
      %p125 = scmp.ne.s32.totalorder %s113, %s114
      %p126 = scmp.eq.s32.totalorder %s20, 1
      %p127 = por %p125, %p126
      %p129 = scmp.ne.s32.totalorder %s114, %s128
      %p130 = scmp.eq.s32.totalorder %s20, 0
      %p131 = por %p129, %p130
      %s132 = ssub.s32 %s14, %s21
      %p133 = scmp.eq.s32.totalorder %s132, 0
      %s135 = sadd.s32 %s134, 1
      %s136 = scalar_select %p133, %s134, %s135
      %p139 = pneg %p133
      %p140 = scmp.eq.s32.totalorder %s14, 1
      %p141 = por %p139, %p140
      %p142 = scmp.ne.s32.totalorder %s134, %s137
      %p143 = scmp.eq.s32.totalorder %s14, 0
      %p144 = por %p142, %p143
      %p145 = scmp.ne.s32.totalorder %s134, %s137
      %p146 = scmp.eq.s32.totalorder %s19, 1
      %p147 = por %p145, %p146
      %p148 = scmp.ne.s32.totalorder %s137, %s138
      %p149 = scmp.eq.s32.totalorder %s19, 0
      %p150 = por %p148, %p149
      %p151 = scmp.ne.s32.totalorder %s137, %s138
      %p152 = scmp.eq.s32.totalorder %s20, 1
      %p153 = por %p151, %p152
      %p155 = scmp.ne.s32.totalorder %s138, %s154
      %p156 = scmp.eq.s32.totalorder %s20, 0
      %p157 = por %p155, %p156
      %p158 = scmp.le.s32.totalorder 1, %s14
      %p159 = scmp.lt.s32.totalorder %s14, 3
      %p160 = pnand %p158, %p159
      %p161 = pneg %p160
      // Predicated region
      $region9: #{tpu_custom_call.1} parent=5 // pred_check
        _
      $region10: #{tpu_custom_call.1} parent=5 // pred_check_branch
        %163 = sbr.rel (%p160) target = $region12
      $region11: #{tpu_custom_call.1} parent=5 // pred_region
        %s164 = ssub.s32 %s14, 1
        // Predicated region
        $region13: #{tpu_custom_call.1} parent=11 // pred_check
          %p165 = pneg %p61
        $region14: #{tpu_custom_call.1} parent=11 // pred_check_branch
          %167 = sbr.rel (%p165) target = $region16
        $region15: #{tpu_custom_call.1} parent=11 // pred_region
          _
        $region16: #{tpu_custom_call.1} parent=11 // pred_fallthru
          _
        // Predicated region
        $region17: #{tpu_custom_call.1} parent=11 // pred_check
          %p168 = pneg %p82
        $region18: #{tpu_custom_call.1} parent=11 // pred_check_branch
          %170 = sbr.rel (%p168) target = $region20
        $region19: #{tpu_custom_call.1} parent=11 // pred_region
          _
        $region20: #{tpu_custom_call.1} parent=11 // pred_fallthru
          _
        // Predicated region
        $region21: #{tpu_custom_call.1} parent=11 // pred_check
          %p171 = pneg %p103
        $region22: #{tpu_custom_call.1} parent=11 // pred_check_branch
          %173 = sbr.rel (%p171) target = $region24
        $region23: #{tpu_custom_call.1} parent=11 // pred_region
          _
        $region24: #{tpu_custom_call.1} parent=11 // pred_fallthru
          _
        // Predicated region
        $region25: #{tpu_custom_call.1} parent=11 // pred_check
          %p174 = pneg %p124
        $region26: #{tpu_custom_call.1} parent=11 // pred_check_branch
          %176 = sbr.rel (%p174) target = $region28
        $region27: #{tpu_custom_call.1} parent=11 // pred_region
          _
        $region28: #{tpu_custom_call.1} parent=11 // pred_fallthru
          _
      $region12: #{tpu_custom_call.1} parent=5 // pred_fallthru
        _
      %p177 = scmp.lt.s32.totalorder %s14, 2
      // Predicated region
      $region29: #{tpu_custom_call.1} parent=5 // pred_check
        %p178 = pneg %p177
      $region30: #{tpu_custom_call.1} parent=5 // pred_check_branch
        %180 = sbr.rel (%p178) target = $region32
      $region31: #{tpu_custom_call.1} parent=5 // pred_region
        // Predicated region
        $region33: #{tpu_custom_call.1} parent=31 // pred_check
          %p181 = pneg %p34
        $region34: #{tpu_custom_call.1} parent=31 // pred_check_branch
          %183 = sbr.rel (%p181) target = $region36
        $region35: #{tpu_custom_call.1} parent=31 // pred_region
          %s184 = smul.u32 7, %s14
          %s185 = ssub.s32 13, %s184
          %p186 = scmp.lt.s32.totalorder %s185, 7
          %s187 = scalar_select %p186, %s185, 7
          %s188 = smul.u32 128, %s187
          %p189 = scmp.lt.s32.totalorder %s184, 12
          %s190 = scalar_select %p189, %s184, 12
          %s191 = smul.addr %s190, 8
          %s192 = scalar_lea.vmem %s0, %s191
          %s193 = smul.u32 7, %s14
          %s194 = ssub.s32 13, %s193
          %p195 = scmp.lt.s32.totalorder %s194, 7
          %s196 = scalar_select %p195, %s194, 7
          %s197 = smul.u32 128, %s196
        $region36: #{tpu_custom_call.1} parent=31 // pred_fallthru
          _
      $region32: #{tpu_custom_call.1} parent=5 // pred_fallthru
        _
      %p198 = scmp.le.s32.totalorder 1, %s14
      %p199 = scmp.lt.s32.totalorder %s14, 3
      %p200 = pnand %p198, %p199
      %p201 = pneg %p200
      // Predicated region
      $region37: #{tpu_custom_call.1} parent=5 // pred_check
        _
      $region38: #{tpu_custom_call.1} parent=5 // pred_check_branch
        %203 = sbr.rel (%p200) target = $region40
      $region39: #{tpu_custom_call.1} parent=5 // pred_region
        %s204 = ssub.s32 %s14, 1
        %s205 = smul.u32 7, %s19
        %s206 = ssub.s32 13, %s205
        %p207 = scmp.lt.s32.totalorder %s206, 7
        %s208 = scalar_select %p207, %s206, 7
        %s209 = smul.u32 128, %s208
        %p210 = scmp.lt.s32.totalorder %s205, 12
        %s211 = scalar_select %p210, %s205, 12
        %s212 = smul.addr %s211, 8
        %s213 = scalar_lea.vmem %s0, %s212
        %p214 = pneg %p40
        %p215 = pneg %p37
        %p216 = pneg %p61
        %p217 = pneg %p58
        %p218 = pneg %p82
        %p219 = pneg %p79
        %p220 = pneg %p103
        %p221 = pneg %p100
        %p222 = pneg %p124
        %p223 = pneg %p121
        %p224 = pneg %p150
        %p225 = pneg %p147
        %s226 = sand.u32 %s137, 1
        %s227 = scalar_lea.sflag [#allocation3], %s226
        %s228 = sand.u32 %s137, 1
        %s229 = scalar_lea.vmem [#allocation2], %s228
        %s230 = smul.u32 7, %s19
        %s231 = ssub.s32 13, %s230
        %p232 = scmp.lt.s32.totalorder %s231, 7
        %s233 = scalar_select %p232, %s231, 7
        %s234 = smul.u32 128, %s233
        %p235 = scmp.lt.s32.totalorder %s230, 12
        %s236 = scalar_select %p235, %s230, 12
        %s237 = smul.addr %s236, 8
        %s238 = scalar_lea.vmem %s0, %s237
        %s239 = smul.u32 7, %s19
        %s240 = ssub.s32 13, %s239
        %p241 = scmp.lt.s32.totalorder %s240, 7
        %s242 = scalar_select %p241, %s240, 7
        %s243 = smul.u32 128, %s242
        %v245 = vld [vmem:[%s238] sm:$0xff]
        %v246 = vld [vmem:[%s238 + $0x8] sm:$0xff]
        %v247 = vld [vmem:[%s238 + $0x10] sm:$0xff]
        %v248 = vld [vmem:[%s238 + $0x18] sm:$0xff]
        %v249 = vld [vmem:[%s238 + $0x20] sm:$0xff]
        %v250 = vld [vmem:[%s238 + $0x28] sm:$0xff]
        %v251 = vld [vmem:[%s238 + $0x30] sm:$0xff]
        %v252 = vpack.c.bf16 %v246, %v245
        %v253 = vpack.c.bf16 %v248, %v247
        %v254 = vpack.c.bf16 %v250, %v249
        %v255 = vpack.c.bf16 %v251, %v251
        %v256 = vld [vmem:[%s1] sm:$0xf]
        %v257 = vld [vmem:[%s1 + $0x4] sm:$0xf]
        %v258 = vld [vmem:[%s2] sm:$0x1]
        %v260 = vlaneseq
        %v261 = vshrl.u32 %v260, 7
        %v262 = vsub.s32 0, %v261
        %v263 = vrot.slane %v258, %v262
        %v267 = vunpack.c.l.b16 %v256
        %v268 = vunpack.c.l.b16 %v257
        %v269 = vpack.c.b16 %v268, %v267
        %vm271 = vcmask 130048
        %v273 = vsel %vm271, %v252, 0
        %v276 = vsel %vm271, %v253, 0
        %v279 = vsel %vm271, %v254, 0
        %v282 = vsel %vm271, %v255, 0
        %284 = vmatprep.subr.bf16.mxu0 0
        %285 = vmatpush1.bf16.msra.mxu0 %v269
        %286 = vmatprep.subr.bf16.mxu0 0
        %287 = vmatpush1.bf16.msra.mxu0 0
        %288 = vmatprep.subr.bf16.mxu0 0
        %289 = vmatpush1.bf16.msra.mxu0 0
        %290 = vmatprep.subr.bf16.mxu0 0
        %291 = vmatpush1.bf16.msra.mxu0 0
        %292 = vmatprep.subr.bf16.mxu0 0
        %293 = vmatpush1.bf16.msra.mxu0 0
        %294 = vmatprep.subr.bf16.mxu0 0
        %295 = vmatpush1.bf16.msra.mxu0 0
        %296 = vmatprep.subr.bf16.mxu0 0
        %297 = vmatpush1.bf16.msra.mxu0 0
        %298 = vmatprep.subr.bf16.mxu0 0
        %299 = vmatpush1.bf16.msra.mxu0 0
        %300 = vmatprep.subr.bf16.mxu0 0
        %301 = vmatpush1.bf16.msra.mxu0 0
        %302 = vmatprep.subr.bf16.mxu0 0
        %303 = vmatpush1.bf16.msra.mxu0 0
        %304 = vmatprep.subr.bf16.mxu0 0
        %305 = vmatpush1.bf16.msra.mxu0 0
        %306 = vmatprep.subr.bf16.mxu0 0
        %307 = vmatpush1.bf16.msra.mxu0 0
        %308 = vmatprep.subr.bf16.mxu0 0
        %309 = vmatpush1.bf16.msra.mxu0 0
        %310 = vmatprep.subr.bf16.mxu0 0
        %311 = vmatpush1.bf16.msra.mxu0 0
        %312 = vmatprep.subr.bf16.mxu0 0
        %313 = vmatpush1.bf16.msra.mxu0 0
        %314 = vmatprep.subr.bf16.mxu0 0
        %315 = vmatpush1.bf16.msra.mxu0 0
        %316 = vmatprep.mubr.bf16.mxu0 0
        %317 = vmatmul.mubr.bf16.gmra.mrb[0].mxu0 %v273
        %v318 = vpop.f32.mrb[0].mxu0
        %v319 = vadd.f32 %v263, %v318
        %v320 = vpop.f32.mrb[0].mxu0
        %v321 = vpop.f32.mrb[0].mxu0
        %v322 = vadd.f32 %v263, %v321
        %v323 = vpop.f32.mrb[0].mxu0
        %324 = vmatprep.mubr.bf16.mxu0 0
        %325 = vmatmul.mubr.bf16.gmra.mrb[0].mxu0 %v276
        %v326 = vpop.f32.mrb[0].mxu0
        %v327 = vadd.f32 %v263, %v326
        %v328 = vpop.f32.mrb[0].mxu0
        %v329 = vpop.f32.mrb[0].mxu0
        %v330 = vadd.f32 %v263, %v329
        %v331 = vpop.f32.mrb[0].mxu0
        %332 = vmatprep.mubr.bf16.mxu0 0
        %333 = vmatmul.mubr.bf16.gmra.mrb[0].mxu0 %v279
        %v334 = vpop.f32.mrb[0].mxu0
        %v335 = vadd.f32 %v263, %v334
        %v336 = vpop.f32.mrb[0].mxu0
        %v337 = vpop.f32.mrb[0].mxu0
        %v338 = vadd.f32 %v263, %v337
        %v339 = vpop.f32.mrb[0].mxu0
        %340 = vmatprep.mubr.bf16.mxu0 0
        %341 = vmatmul.mubr.bf16.gmra.mrb[0].mxu0 %v282
        %v342 = vpop.f32.mrb[0].mxu0
        %v343 = vadd.f32 %v263, %v342
        %v344 = vpop.f32.mrb[0].mxu0
        %v345 = vpop.f32.mrb[0].mxu0
        %v346 = vpop.f32.mrb[0].mxu0
        %347 = vdwg.mxu0
        %v348 = vtanh.pop %v319
        %v349 = vtanh.pop %v322
        %v350 = vtanh.pop %v327
        %v351 = vtanh.pop %v330
        %v352 = vtanh.pop %v335
        %v353 = vtanh.pop %v338
        %v354 = vtanh.pop %v343
        %v355 = vpack.c.bf16 %v349, %v348
        %v356 = vpack.c.bf16 %v351, %v350
        %v357 = vpack.c.bf16 %v353, %v352
        %v358 = vpack.c.bf16 %v354, %v354
        %v359 = vld [vmem:[%s3] sm:$0xf]
        %v360 = vld [vmem:[%s3 + $0x4] sm:$0xf]
        %v361 = vld [vmem:[%s3 + $0x8] sm:$0xf]
        %v362 = vld [vmem:[%s3 + $0xc] sm:$0xf]
        %v363 = vld [vmem:[%s3 + $0x10] sm:$0xf]
        %v364 = vld [vmem:[%s3 + $0x14] sm:$0xf]
        %v365 = vld [vmem:[%s3 + $0x18] sm:$0xf]
        %v366 = vld [vmem:[%s3 + $0x1c] sm:$0xf]
        %v367 = vld [vmem:[%s3 + $0x20] sm:$0xf]
        %v368 = vld [vmem:[%s3 + $0x24] sm:$0xf]
        %v369 = vld [vmem:[%s3 + $0x28] sm:$0xf]
        %v370 = vld [vmem:[%s3 + $0x2c] sm:$0xf]
        %v371 = vld [vmem:[%s3 + $0x30] sm:$0xf]
        %v372 = vld [vmem:[%s3 + $0x34] sm:$0xf]
        %v373 = vld [vmem:[%s3 + $0x38] sm:$0xf]
        %v374 = vld [vmem:[%s3 + $0x3c] sm:$0xf]
        %v375 = vld [vmem:[%s4] sm:$0x1]
        %v377 = vlaneseq
        %v378 = vshrl.u32 %v377, 7
        %v379 = vsub.s32 0, %v378
        %v380 = vrot.slane %v375, %v379
        %v398 = vunpack.c.l.b16 %v359
        %v399 = vunpack.c.l.b16 %v360
        %v400 = vunpack.c.l.b16 %v361
        %v401 = vunpack.c.l.b16 %v362
        %v402 = vunpack.c.l.b16 %v363
        %v403 = vunpack.c.l.b16 %v364
        %v404 = vunpack.c.l.b16 %v365
        %v405 = vunpack.c.l.b16 %v366
        %v406 = vunpack.c.l.b16 %v367
        %v407 = vunpack.c.l.b16 %v368
        %v408 = vunpack.c.l.b16 %v369
        %v409 = vunpack.c.l.b16 %v370
        %v410 = vunpack.c.l.b16 %v371
        %v411 = vunpack.c.l.b16 %v372
        %v412 = vunpack.c.l.b16 %v373
        %v413 = vunpack.c.l.b16 %v374
        %v414 = vpack.c.b16 %v399, %v398
        %v415 = vpack.c.b16 %v401, %v400
        %v416 = vpack.c.b16 %v403, %v402
        %v417 = vpack.c.b16 %v405, %v404
        %v418 = vpack.c.b16 %v407, %v406
        %v419 = vpack.c.b16 %v409, %v408
        %v420 = vpack.c.b16 %v411, %v410
        %v421 = vpack.c.b16 %v413, %v412
        %430 = vmatprep.subr.bf16.mxu0 0
        %431 = vmatpush1.bf16.msra.mxu0 %v414
        %432 = vmatprep.subr.bf16.mxu0 0
        %433 = vmatpush1.bf16.msra.mxu0 %v415
        %434 = vmatprep.subr.bf16.mxu0 0
        %435 = vmatpush1.bf16.msra.mxu0 %v416
        %436 = vmatprep.subr.bf16.mxu0 0
        %437 = vmatpush1.bf16.msra.mxu0 %v417
        %438 = vmatprep.subr.bf16.mxu0 0
        %439 = vmatpush1.bf16.msra.mxu0 %v418
        %440 = vmatprep.subr.bf16.mxu0 0
        %441 = vmatpush1.bf16.msra.mxu0 %v419
        %442 = vmatprep.subr.bf16.mxu0 0
        %443 = vmatpush1.bf16.msra.mxu0 %v420
        %444 = vmatprep.subr.bf16.mxu0 0
        %445 = vmatpush1.bf16.msra.mxu0 %v421
        %446 = vmatprep.subr.bf16.mxu0 0
        %447 = vmatpush1.bf16.msra.mxu0 0
        %448 = vmatprep.subr.bf16.mxu0 0
        %449 = vmatpush1.bf16.msra.mxu0 0
        %450 = vmatprep.subr.bf16.mxu0 0
        %451 = vmatpush1.bf16.msra.mxu0 0
        %452 = vmatprep.subr.bf16.mxu0 0
        %453 = vmatpush1.bf16.msra.mxu0 0
        %454 = vmatprep.subr.bf16.mxu0 0
        %455 = vmatpush1.bf16.msra.mxu0 0
        %456 = vmatprep.subr.bf16.mxu0 0
        %457 = vmatpush1.bf16.msra.mxu0 0
        %458 = vmatprep.subr.bf16.mxu0 0
        %459 = vmatpush1.bf16.msra.mxu0 0
        %460 = vmatprep.subr.bf16.mxu0 0
        %461 = vmatpush1.bf16.msra.mxu0 0
        %462 = vmatprep.mubr.bf16.mxu0 0
        %463 = vmatmul.mubr.bf16.gmra.mrb[0].mxu0 %v355
        %v464 = vpop.f32.mrb[0].mxu0
        %v465 = vadd.f32 %v380, %v464
        %v466 = vpop.f32.mrb[0].mxu0
        %v467 = vpop.f32.mrb[0].mxu0
        %v468 = vadd.f32 %v380, %v467
        %v469 = vpop.f32.mrb[0].mxu0
        %470 = vmatprep.mubr.bf16.mxu0 0
        %471 = vmatmul.mubr.bf16.gmra.mrb[0].mxu0 %v356
        %v472 = vpop.f32.mrb[0].mxu0
        %v473 = vadd.f32 %v380, %v472
        %v474 = vpop.f32.mrb[0].mxu0
        %v475 = vpop.f32.mrb[0].mxu0
        %v476 = vadd.f32 %v380, %v475
        %v477 = vpop.f32.mrb[0].mxu0
        %478 = vmatprep.mubr.bf16.mxu0 0
        %479 = vmatmul.mubr.bf16.gmra.mrb[0].mxu0 %v357
        %v480 = vpop.f32.mrb[0].mxu0
        %v481 = vadd.f32 %v380, %v480
        %v482 = vpop.f32.mrb[0].mxu0
        %v483 = vpop.f32.mrb[0].mxu0
        %v484 = vadd.f32 %v380, %v483
        %v485 = vpop.f32.mrb[0].mxu0
        %486 = vmatprep.mubr.bf16.mxu0 0
        %487 = vmatmul.mubr.bf16.gmra.mrb[0].mxu0 %v358
        %v488 = vpop.f32.mrb[0].mxu0
        %v489 = vadd.f32 %v380, %v488
        %v490 = vpop.f32.mrb[0].mxu0
        %v491 = vpop.f32.mrb[0].mxu0
        %v492 = vpop.f32.mrb[0].mxu0
        %493 = vdwg.mxu0
        %v494 = vtanh.pop %v465
        %v495 = vtanh.pop %v468
        %v496 = vtanh.pop %v473
        %v497 = vtanh.pop %v476
        %v498 = vtanh.pop %v481
        %v499 = vtanh.pop %v484
        %v500 = vtanh.pop %v489
        %p501 = scmp.lt.s32.totalorder %s19, 1
        // Predicated region
        $region41: #{tpu_custom_call.1} parent=39 // pred_check
          %p502 = pneg %p501
        $region42: #{tpu_custom_call.1} parent=39 // pred_check_branch
          %504 = sbr.rel (%p502) target = $region44
        $region43: #{tpu_custom_call.1} parent=39 // pred_region
          %v505 = vadd.f32 %v494, %v495
          %v506 = vadd.f32 %v505, %v496
          %v507 = vadd.f32 %v506, %v497
          %v508 = vadd.f32 %v507, %v498
          %v509 = vadd.f32 %v508, %v499
          %v510 = vadd.f32 %v509, %v500
          %v511 = vrot.slane %v510, 4
          %v512 = vadd.f32 %v510, %v511
          %v513 = vrot.slane %v512, 2
          %v514 = vadd.f32 %v512, %v513
          %v515 = vrot.slane %v514, 1
          %v516 = vadd.f32 %v514, %v515
          %517 = vst [vmem:[%s229] sm:$0x1] %v516
        $region44: #{tpu_custom_call.1} parent=39 // pred_fallthru
          _
        %p518 = scmp.eq.s32.totalorder %s19, 1
        // Predicated region
        $region45: #{tpu_custom_call.1} parent=39 // pred_check
          %p519 = pneg %p518
        $region46: #{tpu_custom_call.1} parent=39 // pred_check_branch
          %521 = sbr.rel (%p519) target = $region48
        $region47: #{tpu_custom_call.1} parent=39 // pred_region
          %s522 = smul.u32 %s19, 56
          %v523 = vlaneseq
          %v524 = vshrl.u32 %v523, 7
          %v525 = vadd.s32 %v524, 8
          %v526 = vadd.s32 %v524, 16
          %v527 = vadd.s32 %v524, 24
          %v528 = vadd.s32 %v524, 32
          %v529 = vadd.s32 %v524, 40
          %v530 = vadd.s32 %v524, 48
          %v531 = vstv %s522
          %v532 = vadd.s32 %v531, %v524
          %v533 = vadd.s32 %v531, %v525
          %v534 = vadd.s32 %v531, %v526
          %v535 = vadd.s32 %v531, %v527
          %v536 = vadd.s32 %v531, %v528
          %v537 = vadd.s32 %v531, %v529
          %v538 = vadd.s32 %v531, %v530
          %vm539 = vcmp.lt.s32.totalorder %v532, 100
          %vm540 = vcmp.lt.s32.totalorder %v533, 100
          %vm541 = vcmp.lt.s32.totalorder %v534, 100
          %vm542 = vcmp.lt.s32.totalorder %v535, 100
          %vm543 = vcmp.lt.s32.totalorder %v536, 100
          %vm544 = vcmp.lt.s32.totalorder %v537, 100
          %vm545 = vcmp.lt.s32.totalorder %v538, 100
          %v546 = vsel %vm539, 1, 0
          %v547 = vsel %vm540, 1, 0
          %v548 = vsel %vm541, 1, 0
          %v549 = vsel %vm542, 1, 0
          %v550 = vsel %vm543, 1, 0
          %v551 = vsel %vm544, 1, 0
          %v552 = vsel %vm545, 1, 0
          %vm553 = vcmp.eq.s32.totalorder %v546, 1
          %vm554 = vcmp.eq.s32.totalorder %v547, 1
          %vm555 = vcmp.eq.s32.totalorder %v548, 1
          %vm556 = vcmp.eq.s32.totalorder %v549, 1
          %vm557 = vcmp.eq.s32.totalorder %v550, 1
          %vm558 = vcmp.eq.s32.totalorder %v551, 1
          %vm559 = vcmp.eq.s32.totalorder %v552, 1
          %v560 = vsel %vm553, %v494, 0.0
          %v561 = vsel %vm554, %v495, 0.0
          %v562 = vsel %vm555, %v496, 0.0
          %v563 = vsel %vm556, %v497, 0.0
          %v564 = vsel %vm557, %v498, 0.0
          %v565 = vsel %vm558, %v499, 0.0
          %v566 = vsel %vm559, %v500, 0.0
          %v567 = vadd.f32 %v560, %v561
          %v568 = vadd.f32 %v567, %v562
          %v569 = vadd.f32 %v568, %v563
          %v570 = vadd.f32 %v569, %v564
          %v571 = vadd.f32 %v570, %v565
          %v572 = vadd.f32 %v571, %v566
          %v573 = vrot.slane %v572, 4
          %v574 = vadd.f32 %v572, %v573
          %v575 = vrot.slane %v574, 2
          %v576 = vadd.f32 %v574, %v575
          %v577 = vrot.slane %v576, 1
          %v578 = vadd.f32 %v576, %v577
          %579 = vst [vmem:[%s229] sm:$0x1] %v578
        $region48: #{tpu_custom_call.1} parent=39 // pred_fallthru
          _
        %s580 = sand.u32 %s137, 1
        %s581 = scalar_lea.sflag [#allocation3], %s580
        %s582 = sand.u32 %s137, 1
        %s583 = scalar_lea.vmem [#allocation2], %s582
        // Predicated region
        $region49: #{tpu_custom_call.1} parent=39 // pred_check
          %p584 = pneg %p147
        $region50: #{tpu_custom_call.1} parent=39 // pred_check_branch
          %586 = sbr.rel (%p584) target = $region52
        $region51: #{tpu_custom_call.1} parent=39 // pred_region
          %s588 = ssub.s32 16, 16
          %589 = vsyncadd %s581, %s588
          %s590 = smul.addr %s19, 16
          %s591 = scalar_lea.hbm %s5, %s590
          %s593 = sshll.u32 %s583, 4
          %s594 = int_to_ptr.vmem [resolvable:$true] %s593
          %596 = dma.vmem_to_hbm [thread:$0]  %s594, 16, %s591, %s581
        $region52: #{tpu_custom_call.1} parent=39 // pred_fallthru
          _
      $region40: #{tpu_custom_call.1} parent=5 // pred_fallthru
        _
      %p597 = scmp.le.s32.totalorder 2, %s14
      // Predicated region
      $region53: #{tpu_custom_call.1} parent=5 // pred_check
        %p598 = pneg %p597
      $region54: #{tpu_custom_call.1} parent=5 // pred_check_branch
        %600 = sbr.rel (%p598) target = $region56
      $region55: #{tpu_custom_call.1} parent=5 // pred_region
        %s601 = ssub.s32 %s14, 2
        // Predicated region
        $region57: #{tpu_custom_call.1} parent=55 // pred_check
          %p602 = pneg %p153
        $region58: #{tpu_custom_call.1} parent=55 // pred_check_branch
          %604 = sbr.rel (%p602) target = $region60
        $region59: #{tpu_custom_call.1} parent=55 // pred_region
          %s605 = sand.u32 %s138, 1
          %s606 = scalar_lea.sflag [#allocation3], %s605
          %s607 = sand.u32 %s138, 1
          %s608 = scalar_lea.vmem [#allocation2], %s607
          %609 = dma.done %s606, 16
        $region60: #{tpu_custom_call.1} parent=55 // pred_fallthru
          _
      $region56: #{tpu_custom_call.1} parent=5 // pred_fallthru
        _
    $region6: #{tpu_custom_call.1} parent=1 // loop_footer
      %s18 = sadd.s32 1, %s14
    $region7: #{tpu_custom_call.1} parent=1 // loop_footer_branch
      %13 = sbr.rel target = $region3
    $region8: #{tpu_custom_call.1} parent=1 // loop_exit
      _
    %610 = vsyncpa [#allocation3], 1
    %s611 = scalar_lea.sflag [#allocation3], 1
    %612 = vsyncpa %s611, 1

</llo_original>
